<compile_context>
chip_gen: v5e
topology: v5e:2x2
jax: 0.10.0
libtpu: 0.0.40
codegen_flags: <defaults>
</compile_context>

<pallas_src>
import functools

import jax
import jax.numpy as jnp
from jax.experimental import pallas as pl
from jax.experimental.pallas import tpu as pltpu


def _round_up(x, m):
    return (x + m - 1) // m * m


def _cdiv(a, b):
    return (a + b - 1) // b


def _label_smoothing_kernel(smoothing, n_valid, pred_ref, target_ref,
                            out_ref, acc_ref):
    p = pl.program_id(0)          # parallel split (TensorCore on v7x)
    i = pl.program_id(1)          # row-block step within this split
    steps = pl.num_programs(1)

    @pl.when(i == 0)
    def _init():
        acc_ref[...] = jnp.zeros_like(acc_ref)

    pred = pred_ref[...].astype(jnp.float32)               # (TN, C)
    tn, c = pred.shape
    confidence = 1.0 - smoothing
    uniform = smoothing / (c - 1)

    # log(softmax + 1e-8), exactly as in the PyTorch module (EUP-bound).
    m = jnp.max(pred, axis=-1, keepdims=True)
    e = jnp.exp(pred - m)
    denom = jnp.sum(e, axis=-1, keepdims=True)
    logp = jnp.log(e * pl.reciprocal(denom, approx=False) + 1e-8)   # (TN, C)

    # sum_c(true_dist * logp) as ONE lane reduction:
    #   w_c = uniform everywhere, confidence at the target column.
    col = jax.lax.broadcasted_iota(jnp.int32, (tn, c), 1)
    tgt = target_ref[...]                                   # (TN, 1) int32
    w = jnp.where(col == tgt, confidence, uniform)          # (TN, C) VPU select
    per_row = -jnp.sum(logp * w, axis=-1, keepdims=True)    # (TN, 1)

    # Mask rows beyond the true batch (uneven last block and clamped
    # duplicate blocks from the 2-way core split contribute zero).
    row = (p * steps + i) * tn + jax.lax.broadcasted_iota(jnp.int32, (tn, 1), 0)
    per_row = jnp.where(row < n_valid, per_row, 0.0)

    acc_ref[...] = acc_ref[...] + per_row                   # plain VPU add

    @pl.when(i == steps - 1)
    def _finalize():
        total = jnp.sum(acc_ref[...], axis=0, keepdims=True)   # (1, 1) XLU once
        out_ref[...] = total.reshape(1, 1, 1)


def label_smoothing_loss(pred, target, smoothing=0.1, block_rows=None):
    """pred: (N, C) float, target: (N,) int. Returns scalar f32 loss."""
    n, c = pred.shape
    itemsize = jnp.dtype(pred.dtype).itemsize
    sublane = max(8, 32 // itemsize)          # 8 f32, 16 bf16, 32 int8/fp8

    # VMEM-budget-driven row tile: double-buffered native-dtype input plus
    # ~4 f32 temporaries per element.  20 MiB working set leaves comfortable
    # headroom on v7x (64 MiB VMEM) as well as v5e/v6e (128 MiB).
    if block_rows is None:
        budget = 20 * 1024 * 1024
        bytes_per_row = 2 * c * itemsize + 4 * c * 4
        tn = budget // bytes_per_row
    else:
        tn = int(block_rows)
    tn = max(sublane, (tn // sublane) * sublane)
    tn = min(tn, 1024, _round_up(n, sublane))

    num_blocks = _cdiv(n, tn)
    num_splits = 2 if num_blocks >= 2 else 1   # v7x: one half per TensorCore
    steps = _cdiv(num_blocks, num_splits)

    def blk(p, i):
        # Clamp overshoot blocks (from the 2-way split) to stay in bounds;
        # their rows are masked out inside the kernel.
        return (jnp.minimum(p * steps + i, num_blocks - 1), 0)

    target2d = target.astype(jnp.int32).reshape(n, 1)

    # Explicit scoped-VMEM limit: estimated live working set with headroom,
    # capped below v7x's 64 MiB physical VMEM.
    vmem_est = 2 * tn * c * itemsize + 4 * tn * c * 4 + 8 * tn * 4 + (64 << 10)
    vmem_limit = int(min(max(2 * vmem_est, 32 << 20), 64 << 20))

    kernel = functools.partial(_label_smoothing_kernel, float(smoothing), n)

    cost = pl.CostEstimate(
        flops=int(6 * n * c),
        transcendentals=int(2 * n * c),
        bytes_accessed=int(n * c * itemsize + n * 4 + 8),
    )

    partials = pl.pallas_call(
        kernel,
        out_shape=jax.ShapeDtypeStruct((num_splits, 1, 1), jnp.float32),
        grid_spec=pltpu.PrefetchScalarGridSpec(
            num_scalar_prefetch=0,
            grid=(num_splits, steps),
            in_specs=[
                pl.BlockSpec((tn, c), blk),
                pl.BlockSpec((tn, 1), blk),
            ],
            out_specs=pl.BlockSpec((1, 1, 1), lambda p, i: (p, 0, 0)),
            scratch_shapes=[pltpu.VMEM((tn, 1), jnp.float32)],
        ),
        compiler_params=pltpu.CompilerParams(
            dimension_semantics=("parallel", "arbitrary"),
            vmem_limit_bytes=vmem_limit,
        ),
        cost_estimate=cost,
    )(pred, target2d)
    return jnp.sum(partials) / n


def _reference(pred, target, smoothing=0.1):
    confidence = 1.0 - smoothing
    p = jax.nn.softmax(pred.astype(jnp.float32), axis=-1) + 1e-8
    logp = jnp.log(p)
    n, c = pred.shape
    true_dist = jnp.full((n, c), smoothing / (c - 1), jnp.float32)
    true_dist = true_dist.at[jnp.arange(n), target].set(confidence)
    return jnp.mean(jnp.sum(-true_dist * logp, axis=-1))


if __name__ == "__main__":
    key = jax.random.PRNGKey(0)
    k1, k2, k3, k4, k5, k6 = jax.random.split(key, 6)

    # Case 1: small single-block grid (no split, even coverage).
    N1, C1 = 8, 128
    pred1 = jax.random.normal(k1, (N1, C1), dtype=jnp.float32)
    tgt1 = jax.random.randint(k2, (N1,), 0, C1, dtype=jnp.int32)
    loss1 = jax.block_until_ready(label_smoothing_loss(pred1, tgt1, 0.1))
    ref1 = _reference(pred1, tgt1, 0.1)
    assert jnp.allclose(loss1, ref1, atol=1e-5, rtol=1e-5), (loss1, ref1)

    # Case 2: ragged N, 2-way split with a clamped duplicate block and an
    # uneven (masked) last block: N=20, tn=8 -> 3 real blocks over a (2,2) grid.
    N2, C2 = 20, 256
    pred2 = jax.random.normal(k3, (N2, C2), dtype=jnp.float32)
    tgt2 = jax.random.randint(k4, (N2,), 0, C2, dtype=jnp.int32)
    loss2 = jax.block_until_ready(
        label_smoothing_loss(pred2, tgt2, 0.1, block_rows=8))
    ref2 = _reference(pred2, tgt2, 0.1)
    assert jnp.allclose(loss2, ref2, atol=1e-5, rtol=1e-5), (loss2, ref2)

    # Case 3: bf16 input (sublane multiple 16), ragged last block, 2-way split.
    N3, C3 = 24, 128
    pred3 = jax.random.normal(k5, (N3, C3), dtype=jnp.float32).astype(jnp.bfloat16)
    tgt3 = jax.random.randint(k6, (N3,), 0, C3, dtype=jnp.int32)
    loss3 = jax.block_until_ready(
        label_smoothing_loss(pred3, tgt3, 0.1, block_rows=16))
    ref3 = _reference(pred3, tgt3, 0.1)
    assert jnp.allclose(loss3, ref3, atol=1e-5, rtol=1e-5), (loss3, ref3)

    print("KERNEL_OK")
</pallas_src>

<mosaic_0001>
module attributes {stable_mosaic.version = 11 : i64} {
  func.func @_label_smoothing_kernel(%arg0: i32, %arg1: i32, %arg2: memref<8x128xf32, #tpu.memory_space<vmem>>, %arg3: memref<8x1xi32, #tpu.memory_space<vmem>>, %arg4: memref<1x1x1xf32, #tpu.memory_space<vmem>>, %arg5: memref<8x1xf32, #tpu.memory_space<vmem>>) attributes {dimension_semantics = [#tpu.dimension_semantics<parallel>, #tpu.dimension_semantics<arbitrary>], iteration_bounds = array<i64: 1, 1>, scalar_prefetch = 0 : i64, scratch_operands = 1 : i64, tpu.core_type = #tpu.core_type<tc>, window_params = [{transform_indices = @transform_0, window_bounds = array<i64: 8, 128>}, {transform_indices = @transform_1, window_bounds = array<i64: 8, 1>}, {transform_indices = @transform_2, window_bounds = array<i64: 1, 1, 1>}]} {
    %c0_i32 = arith.constant 0 : i32
    %0 = arith.cmpi eq, %arg1, %c0_i32 : i32
    %1 = arith.extui %0 : i1 to i32
    %c0_i32_0 = arith.constant 0 : i32
    %2 = arith.cmpi ne, %1, %c0_i32_0 : i32
    scf.if %2 {
      %cst_18 = arith.constant 0.000000e+00 : f32
      %45 = vector.broadcast %cst_18 : f32 to vector<8x1xf32>
      %c0_19 = arith.constant 0 : index
      %c0_20 = arith.constant 0 : index
      %46 = vector.load %arg5[%c0_19, %c0_20] : memref<8x1xf32, #tpu.memory_space<vmem>>, vector<8x1xf32>
      tpu.vector_store %arg5[%c0_19, %c0_20], %45 {strides = array<i32>} : memref<8x1xf32, #tpu.memory_space<vmem>>, vector<8x1xf32>,
    } else {
    }
    %c0 = arith.constant 0 : index
    %c0_1 = arith.constant 0 : index
    %3 = vector.load %arg2[%c0, %c0_1] : memref<8x128xf32, #tpu.memory_space<vmem>>, vector<8x128xf32>
    %cst = arith.constant dense<0xFF800000> : vector<8xf32>
    %4 = vector.multi_reduction <maximumf>, %3, %cst [1] : vector<8x128xf32> to vector<8xf32>
    %5 = vector.shape_cast %4 : vector<8xf32> to vector<8x1xf32>
    %6 = vector.broadcast %5 : vector<8x1xf32> to vector<8x128xf32>
    %7 = arith.subf %3, %6 : vector<8x128xf32>
    %8 = math.exp %7 : vector<8x128xf32>
    %cst_2 = arith.constant dense<0.000000e+00> : vector<8xf32>
    %9 = vector.multi_reduction <add>, %8, %cst_2 [1] : vector<8x128xf32> to vector<8xf32>
    %10 = vector.shape_cast %9 : vector<8xf32> to vector<8x1xf32>
    %11 = tpu.reciprocal %10 : vector<8x1xf32> -> vector<8x1xf32>
    %12 = vector.broadcast %11 : vector<8x1xf32> to vector<8x128xf32>
    %13 = arith.mulf %8, %12 : vector<8x128xf32>
    %cst_3 = arith.constant 9.99999993E-9 : f32
    %14 = vector.broadcast %cst_3 : f32 to vector<8x128xf32>
    %15 = arith.addf %13, %14 : vector<8x128xf32>
    %16 = math.log %15 : vector<8x128xf32>
    %17 = tpu.iota {dimensions = array<i32: 1>} : vector<8x128xi32>
    %c0_4 = arith.constant 0 : index
    %c0_5 = arith.constant 0 : index
    %18 = vector.load %arg3[%c0_4, %c0_5] : memref<8x1xi32, #tpu.memory_space<vmem>>, vector<8x1xi32>
    %19 = vector.broadcast %18 : vector<8x1xi32> to vector<8x128xi32>
    %20 = arith.cmpi eq, %17, %19 : vector<8x128xi32>
    %cst_6 = arith.constant 0.899999976 : f32
    %cst_7 = arith.constant 7.87401571E-4 : f32
    %21 = vector.broadcast %cst_6 : f32 to vector<8x128xf32>
    %22 = vector.broadcast %cst_7 : f32 to vector<8x128xf32>
    %23 = arith.select %20, %21, %22 : vector<8x128xi1>, vector<8x128xf32>
    %24 = arith.mulf %16, %23 : vector<8x128xf32>
    %cst_8 = arith.constant dense<0.000000e+00> : vector<8xf32>
    %25 = vector.multi_reduction <add>, %24, %cst_8 [1] : vector<8x128xf32> to vector<8xf32>
    %26 = vector.shape_cast %25 : vector<8xf32> to vector<8x1xf32>
    %cst_9 = arith.constant 0.000000e+00 : f32
    %27 = vector.broadcast %cst_9 : f32 to vector<8x1xf32>
    %28 = arith.subf %27, %26 : vector<8x1xf32>
    %c1_i32 = arith.constant 1 : i32
    %29 = arith.muli %arg0, %c1_i32 : i32
    %30 = arith.addi %29, %arg1 : i32
    %c8_i32 = arith.constant 8 : i32
    %31 = arith.muli %30, %c8_i32 : i32
    %32 = tpu.iota {dimensions = array<i32: 0>} : vector<8x1xi32>
    %33 = vector.broadcast %31 : i32 to vector<8x1xi32>
    %34 = arith.addi %33, %32 : vector<8x1xi32>
    %c8_i32_10 = arith.constant 8 : i32
    %35 = vector.broadcast %c8_i32_10 : i32 to vector<8x1xi32>
    %36 = arith.cmpi slt, %34, %35 : vector<8x1xi32>
    %cst_11 = arith.constant 0.000000e+00 : f32
    %37 = vector.broadcast %cst_11 : f32 to vector<8x1xf32>
    %38 = arith.select %36, %28, %37 : vector<8x1xi1>, vector<8x1xf32>
    %c0_12 = arith.constant 0 : index
    %c0_13 = arith.constant 0 : index
    %39 = vector.load %arg5[%c0_12, %c0_13] : memref<8x1xf32, #tpu.memory_space<vmem>>, vector<8x1xf32>
    %40 = arith.addf %39, %38 : vector<8x1xf32>
    %c0_14 = arith.constant 0 : index
    %c0_15 = arith.constant 0 : index
    %41 = vector.load %arg5[%c0_14, %c0_15] : memref<8x1xf32, #tpu.memory_space<vmem>>, vector<8x1xf32>
    tpu.vector_store %arg5[%c0_14, %c0_15], %40 {strides = array<i32>} : memref<8x1xf32, #tpu.memory_space<vmem>>, vector<8x1xf32>,
    %c0_i32_16 = arith.constant 0 : i32
    %42 = arith.cmpi eq, %arg1, %c0_i32_16 : i32
    %43 = arith.extui %42 : i1 to i32
    %c0_i32_17 = arith.constant 0 : i32
    %44 = arith.cmpi ne, %43, %c0_i32_17 : i32
    scf.if %44 {
      %c0_18 = arith.constant 0 : index
      %c0_19 = arith.constant 0 : index
      %45 = vector.load %arg5[%c0_18, %c0_19] : memref<8x1xf32, #tpu.memory_space<vmem>>, vector<8x1xf32>
      %cst_20 = arith.constant dense<0.000000e+00> : vector<1xf32>
      %46 = vector.multi_reduction <add>, %45, %cst_20 [0] : vector<8x1xf32> to vector<1xf32>
      %47 = vector.shape_cast %46 : vector<1xf32> to vector<1x1xf32>
      %48 = vector.shape_cast %47 : vector<1x1xf32> to vector<1x1x1xf32>
      %c0_21 = arith.constant 0 : index
      %c0_22 = arith.constant 0 : index
      %c0_23 = arith.constant 0 : index
      %49 = vector.load %arg4[%c0_21, %c0_22, %c0_23] : memref<1x1x1xf32, #tpu.memory_space<vmem>>, vector<1x1x1xf32>
      tpu.vector_store %arg4[%c0_21, %c0_22, %c0_23], %48 {strides = array<i32>} : memref<1x1x1xf32, #tpu.memory_space<vmem>>, vector<1x1x1xf32>,
    } else {
    }
    return
  }
  func.func @transform_0(%arg0: i32, %arg1: i32) -> (i32, i32) {
    %c1_i32 = arith.constant 1 : i32
    %0 = arith.muli %arg0, %c1_i32 : i32
    %1 = arith.addi %0, %arg1 : i32
    %c0_i32 = arith.constant 0 : i32
    %2 = arith.minsi %1, %c0_i32 : i32
    %c0_i32_0 = arith.constant 0 : i32
    %c0_i32_1 = arith.constant 0 : i32
    return %2, %c0_i32_0 : i32, i32
  }
  func.func @transform_1(%arg0: i32, %arg1: i32) -> (i32, i32) {
    %c1_i32 = arith.constant 1 : i32
    %0 = arith.muli %arg0, %c1_i32 : i32
    %1 = arith.addi %0, %arg1 : i32
    %c0_i32 = arith.constant 0 : i32
    %2 = arith.minsi %1, %c0_i32 : i32
    %c0_i32_0 = arith.constant 0 : i32
    %c0_i32_1 = arith.constant 0 : i32
    return %2, %c0_i32_0 : i32, i32
  }
  func.func @transform_2(%arg0: i32, %arg1: i32) -> (i32, i32, i32) {
    %c0_i32 = arith.constant 0 : i32
    %c0_i32_0 = arith.constant 0 : i32
    %c0_i32_1 = arith.constant 0 : i32
    return %arg0, %c0_i32, %c0_i32_0 : i32, i32, i32
  }
}

</mosaic_0001>

<llo_original>
// kernel: tpu_custom_call.1
$region0: #{tpu_custom_call.1}
  #allocation0 [shape = 'u32[]', space=smem, size = 0x4, offset = 0x4, fixed_abs, tag = 'smem constant byte address 0x4 - core index']
  #allocation1 [shape = 'u32[72,128]{1,0:T(1,128)}', space=vmem, size = 0x9000, scoped, tag = 'internal scratch']
  #allocation2 [shape = 'f32[8,1]{1,0:T(8,128)}', space=vmem, size = 0x1000, scoped, tag = 'scratch operand']
  %s0 = inlined_call_operand.vmem [shape: f32[8,128], index: 0, kind: input, shape index: {}]
  %s1 = inlined_call_operand.vmem [shape: s32[8,1], index: 1, kind: input, shape index: {}]
  %s2 = inlined_call_operand.hbm [shape: f32[1,1,1], index: 2, kind: output, shape index: {}]
  %s3 = sld [smem:[#allocation0]]
  $region26: #{tpu_custom_call.1} parent=0
    _
  %s5 = ssub.s32 1, %s3
  %s6 = scalar_select 0, %s5, %s3
  $region1: #{tpu_custom_call.1} parent=0
    #allocation3 [shape = 'u8[512]{0}', space=vmem, size = 0x400, scoped, tag = 'output window, operand 0, single buffered']
    #allocation4 [shape = 's32[1]{0}', space=sflag, size = 0x4, scoped, tag = 'scoped memory for tpu_custom_call.1']
    %7 = vsyncpa [#allocation4], 0
    // Predicated region
    $region2: #{tpu_custom_call.1} parent=1 // pred_check
      _
    $region3: #{tpu_custom_call.1} parent=1 // pred_check_branch
      %9 = sbr.rel (0) target = $region5
    $region4: #{tpu_custom_call.1} parent=1 // pred_region
      %s10 = sadd.s32 0, 0
      %p11 = scmp.lt.s32.totalorder %s10, 0
      %s12 = scalar_select %p11, %s10, 0
      %p13 = scmp.lt.s32.totalorder %s12, 0
      %s14 = scalar_select %p13, %s12, 0
      %s15 = smul.addr %s14, 8
      %s16 = scalar_lea.vmem %s0, %s15
      %s17 = sadd.s32 0, 0
      %p18 = scmp.lt.s32.totalorder %s17, 0
      %s19 = scalar_select %p18, %s17, 0
    $region5: #{tpu_custom_call.1} parent=1 // pred_fallthru
      _
    // Predicated region
    $region6: #{tpu_custom_call.1} parent=1 // pred_check
      _
    $region7: #{tpu_custom_call.1} parent=1 // pred_check_branch
      %21 = sbr.rel (0) target = $region9
    $region8: #{tpu_custom_call.1} parent=1 // pred_region
      %s22 = sadd.s32 0, 0
      %p23 = scmp.lt.s32.totalorder %s22, 0
      %s24 = scalar_select %p23, %s22, 0
      %p25 = scmp.lt.s32.totalorder %s24, 0
      %s26 = scalar_select %p25, %s24, 0
      %s27 = smul.addr %s26, 8
      %s28 = scalar_lea.vmem %s1, %s27
      %s29 = sadd.s32 0, 0
      %p30 = scmp.lt.s32.totalorder %s29, 0
      %s31 = scalar_select %p30, %s29, 0
    $region9: #{tpu_custom_call.1} parent=1 // pred_fallthru
      _
    %s32 = sadd.s32 0, 0
    %p33 = scmp.lt.s32.totalorder %s32, 0
    %s34 = scalar_select %p33, %s32, 0
    %p35 = scmp.lt.s32.totalorder %s34, 0
    %s36 = scalar_select %p35, %s34, 0
    %s37 = smul.addr %s36, 8
    %s38 = scalar_lea.vmem %s0, %s37
    %s39 = sadd.s32 0, 0
    %p40 = scmp.lt.s32.totalorder %s39, 0
    %s41 = scalar_select %p40, %s39, 0
    %p42 = scmp.lt.s32.totalorder %s41, 0
    %s43 = scalar_select %p42, %s41, 0
    %s44 = smul.addr %s43, 8
    %s45 = scalar_lea.vmem %s1, %s44
    %s46 = sadd.s32 0, 0
    %p47 = scmp.lt.s32.totalorder %s46, 0
    %s48 = scalar_select %p47, %s46, 0
    %p49 = scmp.lt.s32.totalorder %s48, 0
    %s50 = scalar_select %p49, %s48, 0
    %s51 = smul.addr %s50, 8
    %s52 = scalar_lea.vmem %s0, %s51
    %s53 = sadd.s32 0, 0
    %p54 = scmp.lt.s32.totalorder %s53, 0
    %s55 = scalar_select %p54, %s53, 0
    %s56 = sadd.s32 0, 0
    %p57 = scmp.lt.s32.totalorder %s56, 0
    %s58 = scalar_select %p57, %s56, 0
    %p59 = scmp.lt.s32.totalorder %s58, 0
    %s60 = scalar_select %p59, %s58, 0
    %s61 = smul.addr %s60, 8
    %s62 = scalar_lea.vmem %s1, %s61
    %s63 = sadd.s32 0, 0
    %p64 = scmp.lt.s32.totalorder %s63, 0
    %s65 = scalar_select %p64, %s63, 0
    %p66 = scmp.eq.s32.totalorder 0, 0
    // Predicated region
    $region10: #{tpu_custom_call.1} parent=1 // pred_check
      %p67 = pneg %p66
    $region11: #{tpu_custom_call.1} parent=1 // pred_check_branch
      %69 = sbr.rel (%p67) target = $region13
    $region12: #{tpu_custom_call.1} parent=1 // pred_region
      %vm70 = vcmask 7168
      %71 = vst.msk [vmem:[#allocation2] sm:$0xff] %vm70, 0.0
    $region13: #{tpu_custom_call.1} parent=1 // pred_fallthru
      _
    %v72 = vld [vmem:[%s52] sm:$0xff]
    %73 = vmax.xlane.f32.xlu0 %v72
    %v74 = vpop.xlane.xlu0 %73
    %v75 = vsub.f32 %v72, %v74
    %v76 = vmul.f32 %v75, 1.442695
    %v77 = vpow.pop %v76
    %78 = vadd.xlane.f32.xlu0 %v77
    %v79 = vpop.xlane.xlu0 %78
    %v80 = vrcp.pop %v79
    %v81 = vmul.f32 %v79, %v80
    %v82 = vsub.f32 1.0, %v81
    %v83 = vmul.f32 %v80, %v82
    %v84 = vadd.f32 %v80, %v83
    %vm85 = vweird.f32 %v79
    %vm86 = vweird.f32 %v80
    %vm87 = vmor %vm85, %vm86
    %v88 = vsel %vm87, %v80, %v84
    %v89 = vand.u32 2147483647, %v79
    %vm90 = vcmp.eq.f32.partialorder %v89, 8.507059e+37
    %v91 = vand.u32 %v79, 2147483648
    %v92 = vor.u32 1.1754944e-38, %v91
    %v93 = vsel %vm90, %v92, %v88
    %v94 = vmul.f32 %v77, %v93
    %v95 = vadd.f32 %v94, 1e-08
    %v96 = vlog2.pop %v95
    %v97 = vmul.f32 %v96, 0.6931472
    %v98 = vlaneseq
    %v99 = vand.u32 %v98, 127
    %v100 = vld [vmem:[%s62] sm:$0xff]
    %101 = vset.pattern.permute.xlu0 0
    %102 = vperm.xlu0 %101, %v100
    %v103 = vpop.permute.xlu0 %102
    %vm104 = vcmp.eq.s32.totalorder %v99, %v103
    %v105 = vsel %vm104, 0.9, 0.0007874016
    %v106 = vmul.f32 %v97, %v105
    %107 = vadd.xlane.f32.xlu0 %v106
    %v108 = vpop.xlane.xlu0 %107
    %v109 = vsub.f32 0.0, %v108
    %s110 = sadd.s32 0, 0
    %s111 = smul.u32 %s110, 8
    %v112 = vlaneseq
    %v113 = vshrl.u32 %v112, 7
    %v114 = vstv %s111
    %v115 = vadd.s32 %v114, %v113
    %vm116 = vcmp.lt.s32.totalorder %v115, 8
    %v117 = vsel %vm116, %v109, 0.0
    %v118 = vld [vmem:[#allocation2] sm:$0xff]
    %v119 = vadd.f32 %v118, %v117
    %vm120 = vcmask 7168
    %121 = vst.msk [vmem:[#allocation2] sm:$0xff] %vm120, %v119
    // Predicated region
    $region14: #{tpu_custom_call.1} parent=1 // pred_check
      %p122 = pneg %p66
    $region15: #{tpu_custom_call.1} parent=1 // pred_check_branch
      %124 = sbr.rel (%p122) target = $region17
    $region16: #{tpu_custom_call.1} parent=1 // pred_region
      %v125 = vld [vmem:[#allocation2] sm:$0xff]
      %v126 = vsel %vm120, %v125, 0.0
      %v127 = vrot.slane %v126, 4
      %v128 = vadd.f32 %v126, %v127
      %v129 = vrot.slane %v128, 2
      %v130 = vadd.f32 %v128, %v129
      %v131 = vrot.slane %v130, 1
      %v132 = vadd.f32 %v130, %v131
      %vm133 = vcmask 0
      %134 = vst.msk [vmem:[#allocation3] sm:$0x1] %vm133, %v132
    $region17: #{tpu_custom_call.1} parent=1 // pred_fallthru
      _
    // Predicated region
    $region18: #{tpu_custom_call.1} parent=1 // pred_check
      _
    $region19: #{tpu_custom_call.1} parent=1 // pred_check_branch
      %136 = sbr.rel (0) target = $region21
    $region20: #{tpu_custom_call.1} parent=1 // pred_region
      %138 = vsyncadd [#allocation4], 0
      %s140 = sshll.u32 [#allocation3], 4
      %s141 = int_to_ptr.vmem [resolvable:$true] %s140
      %s142 = sshll.u32 %s2, 4
      %s143 = int_to_ptr.hbm [resolvable:$true] %s142
      %145 = dma.vmem_to_hbm [thread:$0]  %s141, 16, %s143, [#allocation4]
    $region21: #{tpu_custom_call.1} parent=1 // pred_fallthru
      _
    // Predicated region
    $region22: #{tpu_custom_call.1} parent=1 // pred_check
      _
    $region23: #{tpu_custom_call.1} parent=1 // pred_check_branch
      %147 = sbr.rel (0) target = $region25
    $region24: #{tpu_custom_call.1} parent=1 // pred_region
      %149 = dma.done [#allocation4], 16
    $region25: #{tpu_custom_call.1} parent=1 // pred_fallthru
      _
    %150 = vsyncpa [#allocation4], 1

</llo_original>
